<compile_context>
chip_gen: v7x
topology: tpu7x:2x2x1
jax: 0.10.0
libtpu: 0.0.40
codegen_flags: <defaults>
</compile_context>

<pallas_src>
import functools
import math

import jax
import jax.numpy as jnp
from jax.experimental import pallas as pl
from jax.experimental.pallas import tpu as pltpu

# 48 MiB: comfortably holds 512-class double-buffered f32 blocks (~7-12 MiB needed),
# above v5e's 16 MiB / v6e-v7x's 32 MiB default scoped limits, and still leaves
# headroom on v7x's 64 MiB physical VMEM.
_VMEM_LIMIT_BYTES = 48 * 1024 * 1024
_FAST_PATH_MAX_N = 1024  # f32: x (<=4 MiB) + out (<=4 MiB), even double-buffered << limit


# ---------------------------------------------------------------------------
# Kernels
# ---------------------------------------------------------------------------
def _mm_plus_mm_single_block_kernel(x_ref, o_ref):
    # Whole matrix in VMEM: out = 2 * (x @ x).
    acc = jnp.dot(x_ref[...], x_ref[...], preferred_element_type=jnp.float32)
    o_ref[...] = (2.0 * acc).astype(o_ref.dtype)


def _mm_plus_mm_tiled_kernel(a_ref, b_ref, o_ref, acc_ref):
    # Reduction axis is the last grid axis (k).
    @pl.when(pl.program_id(2) == 0)
    def _():
        acc_ref[...] = jnp.zeros_like(acc_ref)

    acc_ref[...] += jnp.dot(
        a_ref[...], b_ref[...], preferred_element_type=jnp.float32
    )

    @pl.when(pl.program_id(2) == pl.num_programs(2) - 1)
    def _():
        # t1 + t2 == 2 * (x @ x); the *2 rides on the VPU under MXU slack.
        o_ref[...] = (2.0 * acc_ref[...]).astype(o_ref.dtype)


# ---------------------------------------------------------------------------
# Dispatch
# ---------------------------------------------------------------------------
def _single_block_call(x):
    n = x.shape[0]
    return pl.pallas_call(
        _mm_plus_mm_single_block_kernel,
        out_shape=jax.ShapeDtypeStruct((n, n), x.dtype),
        grid=(1,),
        in_specs=[pl.BlockSpec((n, n), lambda i: (0, 0))],
        out_specs=pl.BlockSpec((n, n), lambda i: (0, 0)),
        compiler_params=pltpu.CompilerParams(
            vmem_limit_bytes=_VMEM_LIMIT_BYTES,
        ),
        cost_estimate=pl.CostEstimate(
            flops=2 * n * n * n,
            transcendentals=0,
            bytes_accessed=2 * n * n * x.dtype.itemsize,  # read x once + write out
        ),
    )(x)


def _tiled_call(x, tm, tn, tk):
    N = x.shape[0]

    # Pad to a common multiple of all tile dims (zero padding is exact for matmul).
    lcm = math.lcm(tm, tn, tk)
    Np = pl.cdiv(N, lcm) * lcm
    pad = Np - N
    xp = x if pad == 0 else jnp.pad(x, ((0, pad), (0, pad)))

    grid = (Np // tm, Np // tn, Np // tk)
    itemsize = x.dtype.itemsize
    bytes_accessed = (
        (Np // tn) * Np * Np * itemsize   # LHS re-read once per j-tile
        + (Np // tm) * Np * Np * itemsize  # RHS re-read once per i-tile
        + Np * Np * itemsize               # output write
    )

    out_p = pl.pallas_call(
        _mm_plus_mm_tiled_kernel,
        out_shape=jax.ShapeDtypeStruct((Np, Np), x.dtype),
        grid_spec=pltpu.PrefetchScalarGridSpec(
            num_scalar_prefetch=0,
            grid=grid,
            in_specs=[
                pl.BlockSpec((tm, tk), lambda i, j, k: (i, k)),  # LHS view of x
                pl.BlockSpec((tk, tn), lambda i, j, k: (k, j)),  # RHS view of x
            ],
            out_specs=pl.BlockSpec((tm, tn), lambda i, j, k: (i, j)),
            scratch_shapes=[pltpu.VMEM((tm, tn), jnp.float32)],
        ),
        compiler_params=pltpu.CompilerParams(
            dimension_semantics=("parallel", "parallel", "arbitrary"),
            vmem_limit_bytes=_VMEM_LIMIT_BYTES,
        ),
        cost_estimate=pl.CostEstimate(
            flops=2 * Np * Np * Np,  # one matmul (the second is deduplicated)
            transcendentals=0,
            bytes_accessed=bytes_accessed,
        ),
    )(xp, xp)

    return out_p if pad == 0 else out_p[:N, :N]


@functools.partial(jax.jit, static_argnames=("tm", "tn", "tk"))
def mm_plus_mm(x, *, tm=512, tn=512, tk=512):
    """Computes x @ x + x @ x == 2 * (x @ x) with Pallas TPU kernels."""
    N, M = x.shape
    assert N == M, "torch.mm(input, input) requires a square matrix"

    # Small-N fast path: whole problem fits VMEM; skip grid, pad and slice entirely.
    if N <= _FAST_PATH_MAX_N:
        return _single_block_call(x)

    # Prefer a tile size that divides N (avoids the O(N^2) pad / slice HBM passes);
    # keep tiles at 256-multiples for the 256x256 MXU on v6e/v7x.
    if (N % tm) or (N % tn) or (N % tk):
        for t in (512, 256):
            if N % t == 0:
                tm = tn = tk = t
                break

    return _tiled_call(x, tm, tn, tk)


# TODO(synk): self.linear = nn.Linear(3, 3) from __init__ is never used in forward();
# its parameters are constructed below for fidelity but intentionally not applied.

if __name__ == "__main__":
    key = jax.random.PRNGKey(0)
    k_small, k_big, k_w, k_b = jax.random.split(key, 4)

    # Unused-by-forward Linear(3, 3) parameters, built deterministically for fidelity.
    _linear_w = jax.random.uniform(k_w, (3, 3), jnp.float32, minval=-1.0, maxval=1.0)
    _linear_b = jax.random.uniform(k_b, (3,), jnp.float32, minval=-1.0, maxval=1.0)

    # torch.mm(input, input) requires a square input.
    # N=256 exercises the single-block fast path; N=1536 exercises the tiled
    # (3x3x3 grid, 512-cube tiles, megacore-parallel i/j) path.
    for n, k in ((256, k_small), (1536, k_big)):
        x = jax.random.normal(k, (n, n), dtype=jnp.float32)
        out = jax.block_until_ready(mm_plus_mm(x))

        ref = jnp.dot(x, x, precision=jax.lax.Precision.HIGHEST)
        ref = ref + ref
        assert out.shape == ref.shape
        assert jnp.allclose(out, ref, atol=1e-2, rtol=1e-4), f"mismatch at N={n}"

    print("KERNEL_OK")
</pallas_src>

<mosaic_0001>
module attributes {stable_mosaic.version = 11 : i64} {
  func.func @_mm_plus_mm_single_block_kernel(%arg0: i32, %arg1: memref<256x256xf32, #tpu.memory_space<vmem>>, %arg2: memref<256x256xf32, #tpu.memory_space<vmem>>) attributes {dimension_semantics = [#tpu.dimension_semantics<arbitrary>], iteration_bounds = array<i64: 1>, scalar_prefetch = 0 : i64, scratch_operands = 0 : i64, tpu.core_type = #tpu.core_type<tc>, window_params = [{pipeline_mode = #tpu.pipeline_mode<synchronous>, transform_indices = @transform_0, window_bounds = array<i64: 256, 256>}, {pipeline_mode = #tpu.pipeline_mode<synchronous>, transform_indices = @transform_1, window_bounds = array<i64: 256, 256>}]} {
    %c0 = arith.constant 0 : index
    %c0_0 = arith.constant 0 : index
    %0 = vector.load %arg1[%c0, %c0_0] : memref<256x256xf32, #tpu.memory_space<vmem>>, vector<256x256xf32>
    %c0_1 = arith.constant 0 : index
    %c0_2 = arith.constant 0 : index
    %1 = vector.load %arg1[%c0_1, %c0_2] : memref<256x256xf32, #tpu.memory_space<vmem>>, vector<256x256xf32>
    %cst = arith.constant dense<0.000000e+00> : vector<256x256xf32>
    %2 = tpu.matmul %0, %1, %cst {dimension_numbers = #tpu.dot_dimension_numbers<[1], [0], [0], [1], [0, 0, 1, 1], [], []>} : vector<256x256xf32>, vector<256x256xf32>, vector<256x256xf32> -> vector<256x256xf32>
    %cst_3 = arith.constant 2.000000e+00 : f32
    %3 = vector.broadcast %cst_3 : f32 to vector<256x256xf32>
    %4 = arith.mulf %3, %2 : vector<256x256xf32>
    %c0_4 = arith.constant 0 : index
    %c0_5 = arith.constant 0 : index
    %5 = vector.load %arg2[%c0_4, %c0_5] : memref<256x256xf32, #tpu.memory_space<vmem>>, vector<256x256xf32>
    tpu.vector_store %arg2[%c0_4, %c0_5], %4 {strides = array<i32>} : memref<256x256xf32, #tpu.memory_space<vmem>>, vector<256x256xf32>,
    return
  }
  func.func @transform_0(%arg0: i32) -> (i32, i32) {
    %c0_i32 = arith.constant 0 : i32
    %c0_i32_0 = arith.constant 0 : i32
    %c0_i32_1 = arith.constant 0 : i32
    return %c0_i32, %c0_i32_0 : i32, i32
  }
  func.func @transform_1(%arg0: i32) -> (i32, i32) {
    %c0_i32 = arith.constant 0 : i32
    %c0_i32_0 = arith.constant 0 : i32
    %c0_i32_1 = arith.constant 0 : i32
    return %c0_i32, %c0_i32_0 : i32, i32
  }
}

</mosaic_0001>

<llo_original>
// kernel: mm_plus_mm.1
$region0: #{mm_plus_mm.1}
  #allocation0 [shape = 'u32[]', space=smem, size = 0x4, offset = 0x4, fixed_abs, tag = 'smem constant byte address 0x4 - core index']
  #allocation1 [shape = 'u32[144,128]{1,0:T(1,128)}', space=vmem, size = 0x12000, scoped, tag = 'internal scratch']
  %s0 = inlined_call_operand.hbm [shape: f32[256,256], index: 0, kind: input, shape index: {}]
  %s1 = inlined_call_operand.hbm [shape: f32[256,256], index: 1, kind: output, shape index: {}]
  %s2 = sld [smem:[#allocation0]]
  $region18: #{mm_plus_mm.1} parent=0
    _
  %s4 = ssub.s32 1, %s2
  %s5 = scalar_select 0, %s4, %s2
  $region1: #{mm_plus_mm.1} parent=0
    #allocation2 [shape = 'u8[262144]{0}', space=vmem, size = 0x40000, scoped, tag = 'input window, operand 0, single buffered']
    #allocation3 [shape = 's32[1]{0}', space=sflag, size = 0x4, scoped, tag = 'scoped memory for mm_plus_mm.1']
    #allocation4 [shape = 's32[1]{0}', space=sflag, size = 0x4, scoped, tag = 'scoped memory for mm_plus_mm.1']
    #allocation5 [shape = 'u8[262144]{0}', space=vmem, size = 0x40000, scoped, tag = 'output window, operand 0, single buffered']
    %6 = vsyncpa [#allocation3], 0
    %7 = vsyncpa [#allocation4], 0
    // Predicated region
    $region2: #{mm_plus_mm.1} parent=1 // pred_check
      _
    $region3: #{mm_plus_mm.1} parent=1 // pred_check_branch
      %9 = sbr.rel (0) target = $region5
    $region4: #{mm_plus_mm.1} parent=1 // pred_region
      %s11 = ssub.s32 8192, 8192
      %12 = vsyncadd [#allocation3], %s11
      %s13 = sshll.u32 [#allocation2], 4
      %s14 = int_to_ptr.vmem [resolvable:$true] %s13
      %19 = dma.hbm_to_vmem [thread:$0]  %s0, 8192, %s14, [#allocation3], 256, 256, 16
    $region5: #{mm_plus_mm.1} parent=1 // pred_fallthru
      _
    // Predicated region
    $region6: #{mm_plus_mm.1} parent=1 // pred_check
      _
    $region7: #{mm_plus_mm.1} parent=1 // pred_check_branch
      %21 = sbr.rel (0) target = $region9
    $region8: #{mm_plus_mm.1} parent=1 // pred_region
      %22 = dma.done [#allocation3], 8192
    $region9: #{mm_plus_mm.1} parent=1 // pred_fallthru
      _
    %v23 = vld [vmem:[#allocation2] sm:$0xff]
    %v24 = vld [vmem:[#allocation2 + $0x8] sm:$0xff]
    %v25 = vld [vmem:[#allocation2 + $0x10] sm:$0xff]
    %v26 = vld [vmem:[#allocation2 + $0x18] sm:$0xff]
    %v27 = vld [vmem:[#allocation2 + $0x20] sm:$0xff]
    %v28 = vld [vmem:[#allocation2 + $0x28] sm:$0xff]
    %v29 = vld [vmem:[#allocation2 + $0x30] sm:$0xff]
    %v30 = vld [vmem:[#allocation2 + $0x38] sm:$0xff]
    %v31 = vld [vmem:[#allocation2 + $0x40] sm:$0xff]
    %v32 = vld [vmem:[#allocation2 + $0x48] sm:$0xff]
    %v33 = vld [vmem:[#allocation2 + $0x50] sm:$0xff]
    %v34 = vld [vmem:[#allocation2 + $0x58] sm:$0xff]
    %v35 = vld [vmem:[#allocation2 + $0x60] sm:$0xff]
    %v36 = vld [vmem:[#allocation2 + $0x68] sm:$0xff]
    %v37 = vld [vmem:[#allocation2 + $0x70] sm:$0xff]
    %v38 = vld [vmem:[#allocation2 + $0x78] sm:$0xff]
    %v39 = vld [vmem:[#allocation2 + $0x80] sm:$0xff]
    %v40 = vld [vmem:[#allocation2 + $0x88] sm:$0xff]
    %v41 = vld [vmem:[#allocation2 + $0x90] sm:$0xff]
    %v42 = vld [vmem:[#allocation2 + $0x98] sm:$0xff]
    %v43 = vld [vmem:[#allocation2 + $0xa0] sm:$0xff]
    %v44 = vld [vmem:[#allocation2 + $0xa8] sm:$0xff]
    %v45 = vld [vmem:[#allocation2 + $0xb0] sm:$0xff]
    %v46 = vld [vmem:[#allocation2 + $0xb8] sm:$0xff]
    %v47 = vld [vmem:[#allocation2 + $0xc0] sm:$0xff]
    %v48 = vld [vmem:[#allocation2 + $0xc8] sm:$0xff]
    %v49 = vld [vmem:[#allocation2 + $0xd0] sm:$0xff]
    %v50 = vld [vmem:[#allocation2 + $0xd8] sm:$0xff]
    %v51 = vld [vmem:[#allocation2 + $0xe0] sm:$0xff]
    %v52 = vld [vmem:[#allocation2 + $0xe8] sm:$0xff]
    %v53 = vld [vmem:[#allocation2 + $0xf0] sm:$0xff]
    %v54 = vld [vmem:[#allocation2 + $0xf8] sm:$0xff]
    %v55 = vld [vmem:[#allocation2 + $0x100] sm:$0xff]
    %v56 = vld [vmem:[#allocation2 + $0x108] sm:$0xff]
    %v57 = vld [vmem:[#allocation2 + $0x110] sm:$0xff]
    %v58 = vld [vmem:[#allocation2 + $0x118] sm:$0xff]
    %v59 = vld [vmem:[#allocation2 + $0x120] sm:$0xff]
    %v60 = vld [vmem:[#allocation2 + $0x128] sm:$0xff]
    %v61 = vld [vmem:[#allocation2 + $0x130] sm:$0xff]
    %v62 = vld [vmem:[#allocation2 + $0x138] sm:$0xff]
    %v63 = vld [vmem:[#allocation2 + $0x140] sm:$0xff]
    %v64 = vld [vmem:[#allocation2 + $0x148] sm:$0xff]
    %v65 = vld [vmem:[#allocation2 + $0x150] sm:$0xff]
    %v66 = vld [vmem:[#allocation2 + $0x158] sm:$0xff]
    %v67 = vld [vmem:[#allocation2 + $0x160] sm:$0xff]
    %v68 = vld [vmem:[#allocation2 + $0x168] sm:$0xff]
    %v69 = vld [vmem:[#allocation2 + $0x170] sm:$0xff]
    %v70 = vld [vmem:[#allocation2 + $0x178] sm:$0xff]
    %v71 = vld [vmem:[#allocation2 + $0x180] sm:$0xff]
    %v72 = vld [vmem:[#allocation2 + $0x188] sm:$0xff]
    %v73 = vld [vmem:[#allocation2 + $0x190] sm:$0xff]
    %v74 = vld [vmem:[#allocation2 + $0x198] sm:$0xff]
    %v75 = vld [vmem:[#allocation2 + $0x1a0] sm:$0xff]
    %v76 = vld [vmem:[#allocation2 + $0x1a8] sm:$0xff]
    %v77 = vld [vmem:[#allocation2 + $0x1b0] sm:$0xff]
    %v78 = vld [vmem:[#allocation2 + $0x1b8] sm:$0xff]
    %v79 = vld [vmem:[#allocation2 + $0x1c0] sm:$0xff]
    %v80 = vld [vmem:[#allocation2 + $0x1c8] sm:$0xff]
    %v81 = vld [vmem:[#allocation2 + $0x1d0] sm:$0xff]
    %v82 = vld [vmem:[#allocation2 + $0x1d8] sm:$0xff]
    %v83 = vld [vmem:[#allocation2 + $0x1e0] sm:$0xff]
    %v84 = vld [vmem:[#allocation2 + $0x1e8] sm:$0xff]
    %v85 = vld [vmem:[#allocation2 + $0x1f0] sm:$0xff]
    %v86 = vld [vmem:[#allocation2 + $0x1f8] sm:$0xff]
    %87 = vmatprep.subr.mxu0 %v24
    %88 = vmatpush1.msra.mxu0 %v23
    %89 = vmatprep.subr.mxu0 %v26
    %90 = vmatpush1.msra.mxu0 %v25
    %91 = vmatprep.subr.mxu0 %v28
    %92 = vmatpush1.msra.mxu0 %v27
    %93 = vmatprep.subr.mxu0 %v30
    %94 = vmatpush1.msra.mxu0 %v29
    %95 = vmatprep.subr.mxu0 %v32
    %96 = vmatpush1.msra.mxu0 %v31
    %97 = vmatprep.subr.mxu0 %v34
    %98 = vmatpush1.msra.mxu0 %v33
    %99 = vmatprep.subr.mxu0 %v36
    %100 = vmatpush1.msra.mxu0 %v35
    %101 = vmatprep.subr.mxu0 %v38
    %102 = vmatpush1.msra.mxu0 %v37
    %103 = vmatprep.subr.mxu0 %v40
    %104 = vmatpush1.msra.mxu0 %v39
    %105 = vmatprep.subr.mxu0 %v42
    %106 = vmatpush1.msra.mxu0 %v41
    %107 = vmatprep.subr.mxu0 %v44
    %108 = vmatpush1.msra.mxu0 %v43
    %109 = vmatprep.subr.mxu0 %v46
    %110 = vmatpush1.msra.mxu0 %v45
    %111 = vmatprep.subr.mxu0 %v48
    %112 = vmatpush1.msra.mxu0 %v47
    %113 = vmatprep.subr.mxu0 %v50
    %114 = vmatpush1.msra.mxu0 %v49
    %115 = vmatprep.subr.mxu0 %v52
    %116 = vmatpush1.msra.mxu0 %v51
    %117 = vmatprep.subr.mxu0 %v54
    %118 = vmatpush1.msra.mxu0 %v53
    %119 = vmatprep.subr.mxu0 %v56
    %120 = vmatpush1.msra.mxu0 %v55
    %121 = vmatprep.subr.mxu0 %v58
    %122 = vmatpush1.msra.mxu0 %v57
    %123 = vmatprep.subr.mxu0 %v60
    %124 = vmatpush1.msra.mxu0 %v59
    %125 = vmatprep.subr.mxu0 %v62
    %126 = vmatpush1.msra.mxu0 %v61
    %127 = vmatprep.subr.mxu0 %v64
    %128 = vmatpush1.msra.mxu0 %v63
    %129 = vmatprep.subr.mxu0 %v66
    %130 = vmatpush1.msra.mxu0 %v65
    %131 = vmatprep.subr.mxu0 %v68
    %132 = vmatpush1.msra.mxu0 %v67
    %133 = vmatprep.subr.mxu0 %v70
    %134 = vmatpush1.msra.mxu0 %v69
    %135 = vmatprep.subr.mxu0 %v72
    %136 = vmatpush1.msra.mxu0 %v71
    %137 = vmatprep.subr.mxu0 %v74
    %138 = vmatpush1.msra.mxu0 %v73
    %139 = vmatprep.subr.mxu0 %v76
    %140 = vmatpush1.msra.mxu0 %v75
    %141 = vmatprep.subr.mxu0 %v78
    %142 = vmatpush1.msra.mxu0 %v77
    %143 = vmatprep.subr.mxu0 %v80
    %144 = vmatpush1.msra.mxu0 %v79
    %145 = vmatprep.subr.mxu0 %v82
    %146 = vmatpush1.msra.mxu0 %v81
    %147 = vmatprep.subr.mxu0 %v84
    %148 = vmatpush1.msra.mxu0 %v83
    %149 = vmatprep.subr.mxu0 %v86
    %150 = vmatpush1.msra.mxu0 %v85
    %151 = vmatprep.mubr.f32.mxu0 %v24
    %152 = vmatmul.mubr.f32.gmra.mrb[0].mxu0 %v23
    %v153 = vpop.f32.mrb[0].mxu0
    %v154 = vadd.f32 0.0, %v153
    %v155 = vpop.f32.mrb[0].mxu0
    %v156 = vadd.f32 0.0, %v155
    %157 = vmatprep.mubr.f32.mxu0 %v26
    %158 = vmatmul.mubr.f32.gmra.mrb[0].mxu0 %v25
    %v159 = vpop.f32.mrb[0].mxu0
    %v160 = vadd.f32 0.0, %v159
    %v161 = vpop.f32.mrb[0].mxu0
    %v162 = vadd.f32 0.0, %v161
    %163 = vmatprep.mubr.f32.mxu0 %v28
    %164 = vmatmul.mubr.f32.gmra.mrb[0].mxu0 %v27
    %v165 = vpop.f32.mrb[0].mxu0
    %v166 = vadd.f32 0.0, %v165
    %v167 = vpop.f32.mrb[0].mxu0
    %v168 = vadd.f32 0.0, %v167
    %169 = vmatprep.mubr.f32.mxu0 %v30
    %170 = vmatmul.mubr.f32.gmra.mrb[0].mxu0 %v29
    %v171 = vpop.f32.mrb[0].mxu0
    %v172 = vadd.f32 0.0, %v171
    %v173 = vpop.f32.mrb[0].mxu0
    %v174 = vadd.f32 0.0, %v173
    %175 = vmatprep.mubr.f32.mxu0 %v32
    %176 = vmatmul.mubr.f32.gmra.mrb[0].mxu0 %v31
    %v177 = vpop.f32.mrb[0].mxu0
    %v178 = vadd.f32 0.0, %v177
    %v179 = vpop.f32.mrb[0].mxu0
    %v180 = vadd.f32 0.0, %v179
    %181 = vmatprep.mubr.f32.mxu0 %v34
    %182 = vmatmul.mubr.f32.gmra.mrb[0].mxu0 %v33
    %v183 = vpop.f32.mrb[0].mxu0
    %v184 = vadd.f32 0.0, %v183
    %v185 = vpop.f32.mrb[0].mxu0
    %v186 = vadd.f32 0.0, %v185
    %187 = vmatprep.mubr.f32.mxu0 %v36
    %188 = vmatmul.mubr.f32.gmra.mrb[0].mxu0 %v35
    %v189 = vpop.f32.mrb[0].mxu0
    %v190 = vadd.f32 0.0, %v189
    %v191 = vpop.f32.mrb[0].mxu0
    %v192 = vadd.f32 0.0, %v191
    %193 = vmatprep.mubr.f32.mxu0 %v38
    %194 = vmatmul.mubr.f32.gmra.mrb[0].mxu0 %v37
    %v195 = vpop.f32.mrb[0].mxu0
    %v196 = vadd.f32 0.0, %v195
    %v197 = vpop.f32.mrb[0].mxu0
    %v198 = vadd.f32 0.0, %v197
    %199 = vmatprep.mubr.f32.mxu0 %v40
    %200 = vmatmul.mubr.f32.gmra.mrb[0].mxu0 %v39
    %v201 = vpop.f32.mrb[0].mxu0
    %v202 = vadd.f32 0.0, %v201
    %v203 = vpop.f32.mrb[0].mxu0
    %v204 = vadd.f32 0.0, %v203
    %205 = vmatprep.mubr.f32.mxu0 %v42
    %206 = vmatmul.mubr.f32.gmra.mrb[0].mxu0 %v41
    %v207 = vpop.f32.mrb[0].mxu0
    %v208 = vadd.f32 0.0, %v207
    %v209 = vpop.f32.mrb[0].mxu0
    %v210 = vadd.f32 0.0, %v209
    %211 = vmatprep.mubr.f32.mxu0 %v44
    %212 = vmatmul.mubr.f32.gmra.mrb[0].mxu0 %v43
    %v213 = vpop.f32.mrb[0].mxu0
    %v214 = vadd.f32 0.0, %v213
    %v215 = vpop.f32.mrb[0].mxu0
    %v216 = vadd.f32 0.0, %v215
    %217 = vmatprep.mubr.f32.mxu0 %v46
    %218 = vmatmul.mubr.f32.gmra.mrb[0].mxu0 %v45
    %v219 = vpop.f32.mrb[0].mxu0
    %v220 = vadd.f32 0.0, %v219
    %v221 = vpop.f32.mrb[0].mxu0
    %v222 = vadd.f32 0.0, %v221
    %223 = vmatprep.mubr.f32.mxu0 %v48
    %224 = vmatmul.mubr.f32.gmra.mrb[0].mxu0 %v47
    %v225 = vpop.f32.mrb[0].mxu0
    %v226 = vadd.f32 0.0, %v225
    %v227 = vpop.f32.mrb[0].mxu0
    %v228 = vadd.f32 0.0, %v227
    %229 = vmatprep.mubr.f32.mxu0 %v50
    %230 = vmatmul.mubr.f32.gmra.mrb[0].mxu0 %v49
    %v231 = vpop.f32.mrb[0].mxu0
    %v232 = vadd.f32 0.0, %v231
    %v233 = vpop.f32.mrb[0].mxu0
    %v234 = vadd.f32 0.0, %v233
    %235 = vmatprep.mubr.f32.mxu0 %v52
    %236 = vmatmul.mubr.f32.gmra.mrb[0].mxu0 %v51
    %v237 = vpop.f32.mrb[0].mxu0
    %v238 = vadd.f32 0.0, %v237
    %v239 = vpop.f32.mrb[0].mxu0
    %v240 = vadd.f32 0.0, %v239
    %241 = vmatprep.mubr.f32.mxu0 %v54
    %242 = vmatmul.mubr.f32.gmra.mrb[0].mxu0 %v53
    %v243 = vpop.f32.mrb[0].mxu0
    %v244 = vadd.f32 0.0, %v243
    %v245 = vpop.f32.mrb[0].mxu0
    %v246 = vadd.f32 0.0, %v245
    %247 = vmatprep.mubr.f32.mxu0 %v56
    %248 = vmatmul.mubr.f32.gmra.mrb[0].mxu0 %v55
    %v249 = vpop.f32.mrb[0].mxu0
    %v250 = vadd.f32 0.0, %v249
    %v251 = vpop.f32.mrb[0].mxu0
    %v252 = vadd.f32 0.0, %v251
    %253 = vmatprep.mubr.f32.mxu0 %v58
    %254 = vmatmul.mubr.f32.gmra.mrb[0].mxu0 %v57
    %v255 = vpop.f32.mrb[0].mxu0
    %v256 = vadd.f32 0.0, %v255
    %v257 = vpop.f32.mrb[0].mxu0
    %v258 = vadd.f32 0.0, %v257
    %259 = vmatprep.mubr.f32.mxu0 %v60
    %260 = vmatmul.mubr.f32.gmra.mrb[0].mxu0 %v59
    %v261 = vpop.f32.mrb[0].mxu0
    %v262 = vadd.f32 0.0, %v261
    %v263 = vpop.f32.mrb[0].mxu0
    %v264 = vadd.f32 0.0, %v263
    %265 = vmatprep.mubr.f32.mxu0 %v62
    %266 = vmatmul.mubr.f32.gmra.mrb[0].mxu0 %v61
    %v267 = vpop.f32.mrb[0].mxu0
    %v268 = vadd.f32 0.0, %v267
    %v269 = vpop.f32.mrb[0].mxu0
    %v270 = vadd.f32 0.0, %v269
    %271 = vmatprep.mubr.f32.mxu0 %v64
    %272 = vmatmul.mubr.f32.gmra.mrb[0].mxu0 %v63
    %v273 = vpop.f32.mrb[0].mxu0
    %v274 = vadd.f32 0.0, %v273
    %v275 = vpop.f32.mrb[0].mxu0
    %v276 = vadd.f32 0.0, %v275
    %277 = vmatprep.mubr.f32.mxu0 %v66
    %278 = vmatmul.mubr.f32.gmra.mrb[0].mxu0 %v65
    %v279 = vpop.f32.mrb[0].mxu0
    %v280 = vadd.f32 0.0, %v279
    %v281 = vpop.f32.mrb[0].mxu0
    %v282 = vadd.f32 0.0, %v281
    %283 = vmatprep.mubr.f32.mxu0 %v68
    %284 = vmatmul.mubr.f32.gmra.mrb[0].mxu0 %v67
    %v285 = vpop.f32.mrb[0].mxu0
    %v286 = vadd.f32 0.0, %v285
    %v287 = vpop.f32.mrb[0].mxu0
    %v288 = vadd.f32 0.0, %v287
    %289 = vmatprep.mubr.f32.mxu0 %v70
    %290 = vmatmul.mubr.f32.gmra.mrb[0].mxu0 %v69
    %v291 = vpop.f32.mrb[0].mxu0
    %v292 = vadd.f32 0.0, %v291
    %v293 = vpop.f32.mrb[0].mxu0
    %v294 = vadd.f32 0.0, %v293
    %295 = vmatprep.mubr.f32.mxu0 %v72
    %296 = vmatmul.mubr.f32.gmra.mrb[0].mxu0 %v71
    %v297 = vpop.f32.mrb[0].mxu0
    %v298 = vadd.f32 0.0, %v297
    %v299 = vpop.f32.mrb[0].mxu0
    %v300 = vadd.f32 0.0, %v299
    %301 = vmatprep.mubr.f32.mxu0 %v74
    %302 = vmatmul.mubr.f32.gmra.mrb[0].mxu0 %v73
    %v303 = vpop.f32.mrb[0].mxu0
    %v304 = vadd.f32 0.0, %v303
    %v305 = vpop.f32.mrb[0].mxu0
    %v306 = vadd.f32 0.0, %v305
    %307 = vmatprep.mubr.f32.mxu0 %v76
    %308 = vmatmul.mubr.f32.gmra.mrb[0].mxu0 %v75
    %v309 = vpop.f32.mrb[0].mxu0
    %v310 = vadd.f32 0.0, %v309
    %v311 = vpop.f32.mrb[0].mxu0
    %v312 = vadd.f32 0.0, %v311
    %313 = vmatprep.mubr.f32.mxu0 %v78
    %314 = vmatmul.mubr.f32.gmra.mrb[0].mxu0 %v77
    %v315 = vpop.f32.mrb[0].mxu0
    %v316 = vadd.f32 0.0, %v315
    %v317 = vpop.f32.mrb[0].mxu0
    %v318 = vadd.f32 0.0, %v317
    %319 = vmatprep.mubr.f32.mxu0 %v80
    %320 = vmatmul.mubr.f32.gmra.mrb[0].mxu0 %v79
    %v321 = vpop.f32.mrb[0].mxu0
    %v322 = vadd.f32 0.0, %v321
    %v323 = vpop.f32.mrb[0].mxu0
    %v324 = vadd.f32 0.0, %v323
    %325 = vmatprep.mubr.f32.mxu0 %v82
    %326 = vmatmul.mubr.f32.gmra.mrb[0].mxu0 %v81
    %v327 = vpop.f32.mrb[0].mxu0
    %v328 = vadd.f32 0.0, %v327
    %v329 = vpop.f32.mrb[0].mxu0
    %v330 = vadd.f32 0.0, %v329
    %331 = vmatprep.mubr.f32.mxu0 %v84
    %332 = vmatmul.mubr.f32.gmra.mrb[0].mxu0 %v83
    %v333 = vpop.f32.mrb[0].mxu0
    %v334 = vadd.f32 0.0, %v333
    %v335 = vpop.f32.mrb[0].mxu0
    %v336 = vadd.f32 0.0, %v335
    %337 = vmatprep.mubr.f32.mxu0 %v86
    %338 = vmatmul.mubr.f32.gmra.mrb[0].mxu0 %v85
    %v339 = vpop.f32.mrb[0].mxu0
    %v340 = vadd.f32 0.0, %v339
    %v341 = vpop.f32.mrb[0].mxu0
    %v342 = vadd.f32 0.0, %v341
    %343 = vdwg.mxu0
    %v344 = vmul.f32 %v154, 2.0
    %v345 = vmul.f32 %v156, 2.0
    %v346 = vmul.f32 %v160, 2.0
    %v347 = vmul.f32 %v162, 2.0
    %v348 = vmul.f32 %v166, 2.0
    %v349 = vmul.f32 %v168, 2.0
    %v350 = vmul.f32 %v172, 2.0
    %v351 = vmul.f32 %v174, 2.0
    %v352 = vmul.f32 %v178, 2.0
    %v353 = vmul.f32 %v180, 2.0
    %v354 = vmul.f32 %v184, 2.0
    %v355 = vmul.f32 %v186, 2.0
    %v356 = vmul.f32 %v190, 2.0
    %v357 = vmul.f32 %v192, 2.0
    %v358 = vmul.f32 %v196, 2.0
    %v359 = vmul.f32 %v198, 2.0
    %v360 = vmul.f32 %v202, 2.0
    %v361 = vmul.f32 %v204, 2.0
    %v362 = vmul.f32 %v208, 2.0
    %v363 = vmul.f32 %v210, 2.0
    %v364 = vmul.f32 %v214, 2.0
    %v365 = vmul.f32 %v216, 2.0
    %v366 = vmul.f32 %v220, 2.0
    %v367 = vmul.f32 %v222, 2.0
    %v368 = vmul.f32 %v226, 2.0
    %v369 = vmul.f32 %v228, 2.0
    %v370 = vmul.f32 %v232, 2.0
    %v371 = vmul.f32 %v234, 2.0
    %v372 = vmul.f32 %v238, 2.0
    %v373 = vmul.f32 %v240, 2.0
    %v374 = vmul.f32 %v244, 2.0
    %v375 = vmul.f32 %v246, 2.0
    %v376 = vmul.f32 %v250, 2.0
    %v377 = vmul.f32 %v252, 2.0
    %v378 = vmul.f32 %v256, 2.0
    %v379 = vmul.f32 %v258, 2.0
    %v380 = vmul.f32 %v262, 2.0
    %v381 = vmul.f32 %v264, 2.0
    %v382 = vmul.f32 %v268, 2.0
    %v383 = vmul.f32 %v270, 2.0
    %v384 = vmul.f32 %v274, 2.0
    %v385 = vmul.f32 %v276, 2.0
    %v386 = vmul.f32 %v280, 2.0
    %v387 = vmul.f32 %v282, 2.0
    %v388 = vmul.f32 %v286, 2.0
    %v389 = vmul.f32 %v288, 2.0
    %v390 = vmul.f32 %v292, 2.0
    %v391 = vmul.f32 %v294, 2.0
    %v392 = vmul.f32 %v298, 2.0
    %v393 = vmul.f32 %v300, 2.0
    %v394 = vmul.f32 %v304, 2.0
    %v395 = vmul.f32 %v306, 2.0
    %v396 = vmul.f32 %v310, 2.0
    %v397 = vmul.f32 %v312, 2.0
    %v398 = vmul.f32 %v316, 2.0
    %v399 = vmul.f32 %v318, 2.0
    %v400 = vmul.f32 %v322, 2.0
    %v401 = vmul.f32 %v324, 2.0
    %v402 = vmul.f32 %v328, 2.0
    %v403 = vmul.f32 %v330, 2.0
    %v404 = vmul.f32 %v334, 2.0
    %v405 = vmul.f32 %v336, 2.0
    %v406 = vmul.f32 %v340, 2.0
    %v407 = vmul.f32 %v342, 2.0
    %408 = vst [vmem:[#allocation5] sm:$0xff] %v344
    %409 = vst [vmem:[#allocation5 + $0x8] sm:$0xff] %v345
    %410 = vst [vmem:[#allocation5 + $0x10] sm:$0xff] %v346
    %411 = vst [vmem:[#allocation5 + $0x18] sm:$0xff] %v347
    %412 = vst [vmem:[#allocation5 + $0x20] sm:$0xff] %v348
    %413 = vst [vmem:[#allocation5 + $0x28] sm:$0xff] %v349
    %414 = vst [vmem:[#allocation5 + $0x30] sm:$0xff] %v350
    %415 = vst [vmem:[#allocation5 + $0x38] sm:$0xff] %v351
    %416 = vst [vmem:[#allocation5 + $0x40] sm:$0xff] %v352
    %417 = vst [vmem:[#allocation5 + $0x48] sm:$0xff] %v353
    %418 = vst [vmem:[#allocation5 + $0x50] sm:$0xff] %v354
    %419 = vst [vmem:[#allocation5 + $0x58] sm:$0xff] %v355
    %420 = vst [vmem:[#allocation5 + $0x60] sm:$0xff] %v356
    %421 = vst [vmem:[#allocation5 + $0x68] sm:$0xff] %v357
    %422 = vst [vmem:[#allocation5 + $0x70] sm:$0xff] %v358
    %423 = vst [vmem:[#allocation5 + $0x78] sm:$0xff] %v359
    %424 = vst [vmem:[#allocation5 + $0x80] sm:$0xff] %v360
    %425 = vst [vmem:[#allocation5 + $0x88] sm:$0xff] %v361
    %426 = vst [vmem:[#allocation5 + $0x90] sm:$0xff] %v362
    %427 = vst [vmem:[#allocation5 + $0x98] sm:$0xff] %v363
    %428 = vst [vmem:[#allocation5 + $0xa0] sm:$0xff] %v364
    %429 = vst [vmem:[#allocation5 + $0xa8] sm:$0xff] %v365
    %430 = vst [vmem:[#allocation5 + $0xb0] sm:$0xff] %v366
    %431 = vst [vmem:[#allocation5 + $0xb8] sm:$0xff] %v367
    %432 = vst [vmem:[#allocation5 + $0xc0] sm:$0xff] %v368
    %433 = vst [vmem:[#allocation5 + $0xc8] sm:$0xff] %v369
    %434 = vst [vmem:[#allocation5 + $0xd0] sm:$0xff] %v370
    %435 = vst [vmem:[#allocation5 + $0xd8] sm:$0xff] %v371
    %436 = vst [vmem:[#allocation5 + $0xe0] sm:$0xff] %v372
    %437 = vst [vmem:[#allocation5 + $0xe8] sm:$0xff] %v373
    %438 = vst [vmem:[#allocation5 + $0xf0] sm:$0xff] %v374
    %439 = vst [vmem:[#allocation5 + $0xf8] sm:$0xff] %v375
    %440 = vst [vmem:[#allocation5 + $0x100] sm:$0xff] %v376
    %441 = vst [vmem:[#allocation5 + $0x108] sm:$0xff] %v377
    %442 = vst [vmem:[#allocation5 + $0x110] sm:$0xff] %v378
    %443 = vst [vmem:[#allocation5 + $0x118] sm:$0xff] %v379
    %444 = vst [vmem:[#allocation5 + $0x120] sm:$0xff] %v380
    %445 = vst [vmem:[#allocation5 + $0x128] sm:$0xff] %v381
    %446 = vst [vmem:[#allocation5 + $0x130] sm:$0xff] %v382
    %447 = vst [vmem:[#allocation5 + $0x138] sm:$0xff] %v383
    %448 = vst [vmem:[#allocation5 + $0x140] sm:$0xff] %v384
    %449 = vst [vmem:[#allocation5 + $0x148] sm:$0xff] %v385
    %450 = vst [vmem:[#allocation5 + $0x150] sm:$0xff] %v386
    %451 = vst [vmem:[#allocation5 + $0x158] sm:$0xff] %v387
    %452 = vst [vmem:[#allocation5 + $0x160] sm:$0xff] %v388
    %453 = vst [vmem:[#allocation5 + $0x168] sm:$0xff] %v389
    %454 = vst [vmem:[#allocation5 + $0x170] sm:$0xff] %v390
    %455 = vst [vmem:[#allocation5 + $0x178] sm:$0xff] %v391
    %456 = vst [vmem:[#allocation5 + $0x180] sm:$0xff] %v392
    %457 = vst [vmem:[#allocation5 + $0x188] sm:$0xff] %v393
    %458 = vst [vmem:[#allocation5 + $0x190] sm:$0xff] %v394
    %459 = vst [vmem:[#allocation5 + $0x198] sm:$0xff] %v395
    %460 = vst [vmem:[#allocation5 + $0x1a0] sm:$0xff] %v396
    %461 = vst [vmem:[#allocation5 + $0x1a8] sm:$0xff] %v397
    %462 = vst [vmem:[#allocation5 + $0x1b0] sm:$0xff] %v398
    %463 = vst [vmem:[#allocation5 + $0x1b8] sm:$0xff] %v399
    %464 = vst [vmem:[#allocation5 + $0x1c0] sm:$0xff] %v400
    %465 = vst [vmem:[#allocation5 + $0x1c8] sm:$0xff] %v401
    %466 = vst [vmem:[#allocation5 + $0x1d0] sm:$0xff] %v402
    %467 = vst [vmem:[#allocation5 + $0x1d8] sm:$0xff] %v403
    %468 = vst [vmem:[#allocation5 + $0x1e0] sm:$0xff] %v404
    %469 = vst [vmem:[#allocation5 + $0x1e8] sm:$0xff] %v405
    %470 = vst [vmem:[#allocation5 + $0x1f0] sm:$0xff] %v406
    %471 = vst [vmem:[#allocation5 + $0x1f8] sm:$0xff] %v407
    // Predicated region
    $region10: #{mm_plus_mm.1} parent=1 // pred_check
      _
    $region11: #{mm_plus_mm.1} parent=1 // pred_check_branch
      %473 = sbr.rel (0) target = $region13
    $region12: #{mm_plus_mm.1} parent=1 // pred_region
      %s475 = ssub.s32 8192, 8192
      %476 = vsyncadd [#allocation4], %s475
      %s477 = sshll.u32 [#allocation5], 4
      %s478 = int_to_ptr.vmem [resolvable:$true] %s477
      %483 = dma.vmem_to_hbm [thread:$0]  %s478, 8192, %s1, [#allocation4], 256, 256, 16
    $region13: #{mm_plus_mm.1} parent=1 // pred_fallthru
      _
    // Predicated region
    $region14: #{mm_plus_mm.1} parent=1 // pred_check
      _
    $region15: #{mm_plus_mm.1} parent=1 // pred_check_branch
      %485 = sbr.rel (0) target = $region17
    $region16: #{mm_plus_mm.1} parent=1 // pred_region
      %486 = dma.done [#allocation4], 8192
    $region17: #{mm_plus_mm.1} parent=1 // pred_fallthru
      _
    %487 = vsyncpa [#allocation3], 1
    %488 = vsyncpa [#allocation4], 1

</llo_original>
